<compile_context>
chip_gen: v5e
topology: v5e:2x2
jax: 0.10.0
libtpu: 0.0.40
codegen_flags: <defaults>
</compile_context>

<pallas_src>
import jax
import jax.numpy as jnp
from jax import lax
from jax.experimental import pallas as pl
from jax.experimental.pallas import tpu as pltpu


_HIDDEN = 128     # discriminator hidden width (one MXU lane tile)
_TK = 512         # K (feature) tile for the layer-1 matmul pipeline


# ----------------------------- kernel bodies ------------------------------ #

def _make_hinge_kernel(mode, n_fake, n_real, num_k):
    """Fused discriminator + hinge-loss kernel.

    mode: "gen"     -> loss = -mean(D(fake))                        x = fake
          "gen_new" -> loss = relu(mean(D(real)) - mean(D(fake)))   x = [fake; real]
          "disc"    -> loss = mean(relu(1 - D(real))) + mean(relu(1 + D(fake)))
    """

    def kernel(x_ref, w1_ref, b1_ref, w2_ref, b2_ref, loss_ref, acc_ref):
        k = pl.program_id(0)

        @pl.when(k == 0)
        def _init():
            acc_ref[...] = jnp.zeros_like(acc_ref)

        # Layer-1 partial matmul on the MXU: bf16 x bf16 -> f32 accumulate.
        acc_ref[...] += jnp.dot(x_ref[...], w1_ref[...],
                                preferred_element_type=jnp.float32)

        @pl.when(k == num_k - 1)
        def _epilogue():
            h = acc_ref[...] + b1_ref[...]          # (M, H) f32
            h = jnp.maximum(h, 0.2 * h)             # LeakyReLU(0.2), single vmax
            w2c = w2_ref[...]                       # (H, 1)

            if mode == "gen":
                # Batch mean folded before the layer-2 dot (layer 2 is linear).
                mean_h = jnp.sum(h, axis=0, keepdims=True) * (1.0 / n_fake)
                s = (jnp.dot(mean_h, w2c, preferred_element_type=jnp.float32)
                     + b2_ref[...])
                loss_ref[0, 0] = -s[0, 0]

            elif mode == "gen_new":
                rows = lax.broadcasted_iota(jnp.int32, h.shape, 0)
                is_fake = rows < n_fake
                mean_f = (jnp.sum(jnp.where(is_fake, h, 0.0), axis=0,
                                  keepdims=True) * (1.0 / n_fake))
                mean_r = (jnp.sum(jnp.where(is_fake, 0.0, h), axis=0,
                                  keepdims=True) * (1.0 / n_real))
                # b2 cancels in mean(D(real)) - mean(D(fake)).
                diff = jnp.dot(mean_r - mean_f, w2c,
                               preferred_element_type=jnp.float32)
                loss_ref[0, 0] = jnp.maximum(diff[0, 0], 0.0)

            else:  # "disc": hinge is per-sample, keep per-row scores
                s = (jnp.dot(h, w2c, preferred_element_type=jnp.float32)
                     + b2_ref[...])                 # (M, 1)
                rows = lax.broadcasted_iota(jnp.int32, s.shape, 0)
                is_fake = rows < n_fake
                fake_term = (jnp.sum(jnp.where(is_fake,
                                               jnp.maximum(1.0 + s, 0.0), 0.0))
                             * (1.0 / n_fake))
                real_term = (jnp.sum(jnp.where(is_fake, 0.0,
                                               jnp.maximum(1.0 - s, 0.0)))
                             * (1.0 / n_real))
                loss_ref[0, 0] = fake_term + real_term

    return kernel


# ------------------------------- wrapper ----------------------------------- #

def _hinge_loss_pallas(x, w1, b1, w2_col, b2, mode, n_fake):
    """x: (M, D) bf16 stacked batch; w1: (D, H) bf16; b1/(w2_col)/b2 f32."""
    m, d = x.shape
    hd = w1.shape[1]
    n_real = m - n_fake

    # Pad the feature (K) axis to a multiple of the K tile (zeros are inert).
    d_pad = ((d + _TK - 1) // _TK) * _TK
    if d_pad != d:
        x = jnp.pad(x, ((0, 0), (0, d_pad - d)))
        w1 = jnp.pad(w1, ((0, d_pad - d), (0, 0)))
    num_k = d_pad // _TK

    kernel = _make_hinge_kernel(mode, n_fake, n_real, num_k)

    grid_spec = pltpu.PrefetchScalarGridSpec(
        num_scalar_prefetch=0,
        grid=(num_k,),
        in_specs=[
            pl.BlockSpec((m, _TK), lambda k: (0, k)),    # stacked inputs (bf16)
            pl.BlockSpec((_TK, hd), lambda k: (k, 0)),   # w1 K-tile      (bf16)
            pl.BlockSpec((1, hd), lambda k: (0, 0)),     # b1
            pl.BlockSpec((hd, 1), lambda k: (0, 0)),     # w2 column
            pl.BlockSpec((1, 1), lambda k: (0, 0)),      # b2
        ],
        out_specs=pl.BlockSpec(memory_space=pltpu.MemorySpace.SMEM),
        scratch_shapes=[pltpu.VMEM((m, hd), jnp.float32)],
    )

    # Scheduler hint + explicit (generous, chip-safe) VMEM budget.
    flops = 2 * m * d_pad * hd + 2 * m * hd
    bytes_accessed = (x.size * x.dtype.itemsize
                      + w1.size * w1.dtype.itemsize
                      + (b1.size + w2_col.size + b2.size) * 4 + 4)
    tile_bytes = 2 * (m * _TK * 2 + _TK * hd * 2)        # double-buffered bf16 tiles
    vmem_limit = int(max(4 * tile_bytes + (1 << 20), 8 << 20))

    loss = pl.pallas_call(
        kernel,
        out_shape=jax.ShapeDtypeStruct((1, 1), jnp.float32),
        grid_spec=grid_spec,
        compiler_params=pltpu.CompilerParams(
            dimension_semantics=("arbitrary",),
            vmem_limit_bytes=vmem_limit,
        ),
        cost_estimate=pl.CostEstimate(
            flops=int(flops), transcendentals=0,
            bytes_accessed=int(bytes_accessed)),
    )(x, w1, b1, w2_col, b2)
    return loss[0, 0]


# -------------------------------- module ----------------------------------- #

class Hinge:
    """JAX/Pallas port of the PyTorch `Hinge(discriminator)` module with a
    deterministic synthetic MLP discriminator baked in."""

    def __init__(self, d_in, hidden=_HIDDEN, key=None):
        if key is None:
            key = jax.random.PRNGKey(42)
        k1, k2 = jax.random.split(key)
        w1 = (jax.random.normal(k1, (d_in, hidden), jnp.float32)
              * (1.0 / jnp.sqrt(jnp.float32(d_in))))
        w2 = (jax.random.normal(k2, (hidden,), jnp.float32)
              * (1.0 / jnp.sqrt(jnp.float32(hidden))))
        # bf16 weights for the HBM-bound layer-1 stream (f32 MXU accumulation);
        # the tiny layer-2 params stay f32.
        self.w1 = w1.astype(jnp.bfloat16)
        self.b1 = jnp.zeros((1, hidden), jnp.float32)
        self.w2_col = w2.reshape(hidden, 1)   # column layout -> layer-2 dot on MXU
        self.b2 = jnp.zeros((1, 1), jnp.float32)

    @staticmethod
    def _flatten(x):
        x = x.reshape(x.shape[0], -1)
        return x if x.dtype == jnp.bfloat16 else x.astype(jnp.bfloat16)

    def __call__(self, fake_samples, real_samples=None, generator=True,
                 label=None, new_Hinge=False):
        # TODO(synk): `label` (conditional-discriminator branch) is accepted but
        # ignored -- the synthetic discriminator here is unconditional.
        fake = self._flatten(fake_samples)
        n_fake = fake.shape[0]
        needs_real = (not generator) or new_Hinge
        if needs_real:
            if real_samples is None:
                raise ValueError("real_samples is required for this Hinge mode")
            real = self._flatten(real_samples)
            x = jnp.concatenate([fake, real], axis=0)   # one MXU pass for both
            mode = "gen_new" if generator else "disc"
        else:
            x = fake
            mode = "gen"
        return _hinge_loss_pallas(x, self.w1, self.b1, self.w2_col, self.b2,
                                  mode, n_fake)

    # pure-JAX reference (verification only; same bf16 inputs / f32 accumulation)
    def _ref_scores(self, x):
        x = self._flatten(x)
        h = jnp.dot(x, self.w1, preferred_element_type=jnp.float32) + self.b1
        h = jnp.maximum(h, 0.2 * h)
        return jnp.dot(h, self.w2_col, preferred_element_type=jnp.float32) + self.b2

    def _ref(self, fake_samples, real_samples=None, generator=True,
             new_Hinge=False):
        fake = self._ref_scores(fake_samples)
        if generator:
            if new_Hinge:
                real = self._ref_scores(real_samples)
                return jnp.maximum(jnp.mean(real) - jnp.mean(fake), 0.0)
            return -jnp.mean(fake)
        real = self._ref_scores(real_samples)
        return (jnp.mean(jnp.maximum(1.0 - real, 0.0)) +
                jnp.mean(jnp.maximum(1.0 + fake, 0.0)))


# --------------------------------- main ------------------------------------ #

if __name__ == "__main__":
    key = jax.random.PRNGKey(0)
    k_fake, k_real = jax.random.split(key)

    N, C, H, W = 2, 4, 16, 16                     # NCHW, like PyTorch
    fake_samples = jax.random.normal(k_fake, (N, C, H, W), jnp.float32)
    real_samples = jax.random.normal(k_real, (N, C, H, W), jnp.float32)

    hinge = Hinge(d_in=C * H * W, hidden=_HIDDEN)

    # generator loss (default):  -mean(D(fake))
    g_loss = jax.block_until_ready(hinge(fake_samples, generator=True))
    # generator loss (new_Hinge): relu(mean(D(real)) - mean(D(fake)))
    g_new_loss = jax.block_until_ready(
        hinge(fake_samples, real_samples, generator=True, new_Hinge=True))
    # discriminator loss: mean(relu(1-D(real))) + mean(relu(1+D(fake)))
    d_loss = jax.block_until_ready(
        hinge(fake_samples, real_samples, generator=False))

    # verify against the pure-JAX reference
    assert jnp.allclose(g_loss, hinge._ref(fake_samples, generator=True),
                        atol=1e-3, rtol=1e-3)
    assert jnp.allclose(g_new_loss,
                        hinge._ref(fake_samples, real_samples,
                                   generator=True, new_Hinge=True),
                        atol=1e-3, rtol=1e-3)
    assert jnp.allclose(d_loss,
                        hinge._ref(fake_samples, real_samples, generator=False),
                        atol=1e-3, rtol=1e-3)

    print("KERNEL_OK")
</pallas_src>

<mosaic_0001>
module attributes {stable_mosaic.version = 11 : i64} {
  func.func @kernel(%arg0: i32, %arg1: memref<2x512xbf16, #tpu.memory_space<vmem>>, %arg2: memref<512x128xbf16, #tpu.memory_space<vmem>>, %arg3: memref<1x128xf32, #tpu.memory_space<vmem>>, %arg4: memref<128x1xf32, #tpu.memory_space<vmem>>, %arg5: memref<1x1xf32, #tpu.memory_space<vmem>>, %arg6: memref<1x1xf32, #tpu.memory_space<smem>>, %arg7: memref<2x128xf32, #tpu.memory_space<vmem>>) attributes {dimension_semantics = [#tpu.dimension_semantics<arbitrary>], iteration_bounds = array<i64: 2>, scalar_prefetch = 0 : i64, scratch_operands = 1 : i64, tpu.core_type = #tpu.core_type<tc>, window_params = [{transform_indices = @transform_0, window_bounds = array<i64: 2, 512>}, {transform_indices = @transform_1, window_bounds = array<i64: 512, 128>}, {pipeline_mode = #tpu.pipeline_mode<synchronous>, transform_indices = @transform_2, window_bounds = array<i64: 1, 128>}, {pipeline_mode = #tpu.pipeline_mode<synchronous>, transform_indices = @transform_3, window_bounds = array<i64: 128, 1>}, {pipeline_mode = #tpu.pipeline_mode<synchronous>, transform_indices = @transform_4, window_bounds = array<i64: 1, 1>}, {transform_indices = @transform_5, window_bounds = array<i64: 1, 1>}]} {
    %c0_i32 = arith.constant 0 : i32
    %0 = arith.cmpi eq, %arg0, %c0_i32 : i32
    %1 = arith.extui %0 : i1 to i32
    %c0_i32_0 = arith.constant 0 : i32
    %2 = arith.cmpi ne, %1, %c0_i32_0 : i32
    scf.if %2 {
      %cst_9 = arith.constant 0.000000e+00 : f32
      %12 = vector.broadcast %cst_9 : f32 to vector<2x128xf32>
      %c0_10 = arith.constant 0 : index
      %c0_11 = arith.constant 0 : index
      %13 = vector.load %arg7[%c0_10, %c0_11] : memref<2x128xf32, #tpu.memory_space<vmem>>, vector<2x128xf32>
      tpu.vector_store %arg7[%c0_10, %c0_11], %12 {strides = array<i32>} : memref<2x128xf32, #tpu.memory_space<vmem>>, vector<2x128xf32>,
    } else {
    }
    %c0 = arith.constant 0 : index
    %c0_1 = arith.constant 0 : index
    %3 = vector.load %arg7[%c0, %c0_1] : memref<2x128xf32, #tpu.memory_space<vmem>>, vector<2x128xf32>
    %c0_2 = arith.constant 0 : index
    %c0_3 = arith.constant 0 : index
    %4 = vector.load %arg1[%c0_2, %c0_3] : memref<2x512xbf16, #tpu.memory_space<vmem>>, vector<2x512xbf16>
    %c0_4 = arith.constant 0 : index
    %c0_5 = arith.constant 0 : index
    %5 = vector.load %arg2[%c0_4, %c0_5] : memref<512x128xbf16, #tpu.memory_space<vmem>>, vector<512x128xbf16>
    %cst = arith.constant dense<0.000000e+00> : vector<2x128xf32>
    %6 = tpu.matmul %4, %5, %cst {dimension_numbers = #tpu.dot_dimension_numbers<[1], [0], [0], [1], [0, 0, 1, 1], [], []>} : vector<2x512xbf16>, vector<512x128xbf16>, vector<2x128xf32> -> vector<2x128xf32>
    %7 = arith.addf %3, %6 : vector<2x128xf32>
    %c0_6 = arith.constant 0 : index
    %c0_7 = arith.constant 0 : index
    %8 = vector.load %arg7[%c0_6, %c0_7] : memref<2x128xf32, #tpu.memory_space<vmem>>, vector<2x128xf32>
    tpu.vector_store %arg7[%c0_6, %c0_7], %7 {strides = array<i32>} : memref<2x128xf32, #tpu.memory_space<vmem>>, vector<2x128xf32>,
    %c1_i32 = arith.constant 1 : i32
    %9 = arith.cmpi eq, %arg0, %c1_i32 : i32
    %10 = arith.extui %9 : i1 to i32
    %c0_i32_8 = arith.constant 0 : i32
    %11 = arith.cmpi ne, %10, %c0_i32_8 : i32
    scf.if %11 {
      %c0_9 = arith.constant 0 : index
      %c0_10 = arith.constant 0 : index
      %12 = vector.load %arg7[%c0_9, %c0_10] : memref<2x128xf32, #tpu.memory_space<vmem>>, vector<2x128xf32>
      %c0_11 = arith.constant 0 : index
      %c0_12 = arith.constant 0 : index
      %13 = vector.load %arg3[%c0_11, %c0_12] : memref<1x128xf32, #tpu.memory_space<vmem>>, vector<1x128xf32>
      %14 = vector.broadcast %13 : vector<1x128xf32> to vector<2x128xf32>
      %15 = arith.addf %12, %14 : vector<2x128xf32>
      %cst_13 = arith.constant 2.000000e-01 : f32
      %16 = vector.broadcast %cst_13 : f32 to vector<2x128xf32>
      %17 = arith.mulf %16, %15 : vector<2x128xf32>
      %18 = arith.maximumf %15, %17 : vector<2x128xf32>
      %c0_14 = arith.constant 0 : index
      %c0_15 = arith.constant 0 : index
      %19 = vector.load %arg4[%c0_14, %c0_15] : memref<128x1xf32, #tpu.memory_space<vmem>>, vector<128x1xf32>
      %cst_16 = arith.constant dense<0.000000e+00> : vector<128xf32>
      %20 = vector.multi_reduction <add>, %18, %cst_16 [0] : vector<2x128xf32> to vector<128xf32>
      %21 = vector.shape_cast %20 : vector<128xf32> to vector<1x128xf32>
      %cst_17 = arith.constant 5.000000e-01 : f32
      %22 = vector.broadcast %cst_17 : f32 to vector<1x128xf32>
      %23 = arith.mulf %21, %22 : vector<1x128xf32>
      %cst_18 = arith.constant dense<0.000000e+00> : vector<1x1xf32>
      %24 = tpu.matmul %23, %19, %cst_18 {dimension_numbers = #tpu.dot_dimension_numbers<[1], [0], [0], [1], [0, 0, 1, 1], [], []>} : vector<1x128xf32>, vector<128x1xf32>, vector<1x1xf32> -> vector<1x1xf32>
      %c0_19 = arith.constant 0 : index
      %c0_20 = arith.constant 0 : index
      %25 = vector.load %arg5[%c0_19, %c0_20] : memref<1x1xf32, #tpu.memory_space<vmem>>, vector<1x1xf32>
      %26 = arith.addf %24, %25 : vector<1x1xf32>
      %27 = vector.extract %26[0, 0] : f32 from vector<1x1xf32>
      %cst_21 = arith.constant 0.000000e+00 : f32
      %28 = arith.subf %cst_21, %27 : f32
      %c0_22 = arith.constant 0 : index
      %c0_23 = arith.constant 0 : index
      %29 = memref.load %arg6[%c0_22, %c0_23] : memref<1x1xf32, #tpu.memory_space<smem>>
      memref.store %28, %arg6[%c0_22, %c0_23] : memref<1x1xf32, #tpu.memory_space<smem>>
    } else {
    }
    return
  }
  func.func @transform_0(%arg0: i32) -> (i32, i32) {
    %c0_i32 = arith.constant 0 : i32
    %c0_i32_0 = arith.constant 0 : i32
    return %c0_i32, %arg0 : i32, i32
  }
  func.func @transform_1(%arg0: i32) -> (i32, i32) {
    %c0_i32 = arith.constant 0 : i32
    %c0_i32_0 = arith.constant 0 : i32
    return %arg0, %c0_i32 : i32, i32
  }
  func.func @transform_2(%arg0: i32) -> (i32, i32) {
    %c0_i32 = arith.constant 0 : i32
    %c0_i32_0 = arith.constant 0 : i32
    %c0_i32_1 = arith.constant 0 : i32
    return %c0_i32, %c0_i32_0 : i32, i32
  }
  func.func @transform_3(%arg0: i32) -> (i32, i32) {
    %c0_i32 = arith.constant 0 : i32
    %c0_i32_0 = arith.constant 0 : i32
    %c0_i32_1 = arith.constant 0 : i32
    return %c0_i32, %c0_i32_0 : i32, i32
  }
  func.func @transform_4(%arg0: i32) -> (i32, i32) {
    %c0_i32 = arith.constant 0 : i32
    %c0_i32_0 = arith.constant 0 : i32
    %c0_i32_1 = arith.constant 0 : i32
    return %c0_i32, %c0_i32_0 : i32, i32
  }
  func.func @transform_5(%arg0: i32) -> (i32, i32) {
    %c0_i32 = arith.constant 0 : i32
    %c0_i32_0 = arith.constant 0 : i32
    %c0_i32_1 = arith.constant 0 : i32
    return %c0_i32, %c0_i32_0 : i32, i32
  }
}

</mosaic_0001>

<llo_original>
// kernel: tpu_custom_call.1
$region0: #{tpu_custom_call.1}
  #allocation0 [shape = 'u32[]', space=smem, size = 0x4, offset = 0x4, fixed_abs, tag = 'smem constant byte address 0x4 - core index']
  #allocation1 [shape = 'u32[72,128]{1,0:T(1,128)}', space=vmem, size = 0x9000, scoped, tag = 'internal scratch']
  #allocation2 [shape = 'f32[2,128]{1,0:T(2,128)}', space=vmem, size = 0x400, scoped, tag = 'scratch operand']
  #allocation3 [shape = 'f32[1,1]{1,0:T(1,128)S(1)}', space=vmem, size = 0x200, scoped, tag = 'scoped memory for tpu_custom_call.1']
  %s0 = inlined_call_operand.vmem [shape: bf16[2,1024], index: 0, kind: input, shape index: {}]
  %s1 = inlined_call_operand.hbm [shape: bf16[1024,128], index: 1, kind: input, shape index: {}]
  %s2 = inlined_call_operand.vmem [shape: f32[1,128], index: 2, kind: input, shape index: {}]
  %s3 = inlined_call_operand.vmem [shape: f32[128,1], index: 3, kind: input, shape index: {}]
  %s4 = inlined_call_operand.<no memory space> [shape: f32[1,1], index: 4, kind: input, shape index: {}]
  %s5 = inlined_call_operand.hbm [shape: f32[1,1], index: 5, kind: output, shape index: {}]
  %s6 = sld [smem:[#allocation0]]
  $region65: #{tpu_custom_call.1} parent=0
    _
  %s8 = ssub.s32 1, %s6
  %s9 = scalar_select 0, %s8, %s6
  %v10 = vstv %s4
  %11 = vst [vmem:[#allocation3] sm:$0x1] %v10
  $region1: #{tpu_custom_call.1} parent=0
    #allocation4 [shape = 'u8[262144]{0}', space=vmem, size = 0x40000, scoped, tag = 'input window, operand 1']
    #allocation5 [shape = 's32[2]{0}', space=sflag, size = 0x8, scoped, tag = 'scoped memory for tpu_custom_call.1']
    #allocation6 [shape = 's32[2]{0}', space=sflag, size = 0x8, scoped, tag = 'scoped memory for tpu_custom_call.1']
    #allocation7 [shape = 'u8[512]{0}', space=smem, size = 0x200, scoped, tag = 'output window, operand 0, single buffered']
    %12 = vsyncpa [#allocation5], 0
    %s13 = scalar_lea.sflag [#allocation5], 1
    %14 = vsyncpa %s13, 0
    %15 = vsyncpa [#allocation6], 0
    loop: start=0, step=1, limit=4
    $region2: #{tpu_custom_call.1} parent=1 // loop_pre_header
      _
    $region3: #{tpu_custom_call.1} parent=1 // loop_header
      %s17 = sphi 0, %s21
      %p18 = scmp.ge.s32.totalorder %s17, 4
      %s27 = sphi 0, %s29
      %s30 = sphi 0, %s27
      %s31 = sphi 0, %s30
      %s47 = sphi 0, %s31
      %s53 = sphi 0, %s55
      %s56 = sphi 0, %s53
      %s57 = sphi 0, %s56
      %s73 = sphi 0, %s57
      %s77 = sphi 0, %s77
      %s79 = sphi 0, %s77
      %s80 = sphi 0, %s79
      %s94 = sphi 0, %s80
      %s98 = sphi 0, %s98
      %s100 = sphi 0, %s98
      %s101 = sphi 0, %s100
      %s115 = sphi 0, %s101
      %s119 = sphi 0, %s119
      %s121 = sphi 0, %s119
      %s122 = sphi 0, %s121
      %s136 = sphi 0, %s122
      %s140 = sphi 0, %s140
      %s142 = sphi 0, %s140
      %s143 = sphi 0, %s142
      %s157 = sphi 0, %s143
    $region4: #{tpu_custom_call.1} parent=1 // loop_header_branch
      %20 = sbr.rel (%p18) target = $region8
    $region5: #{tpu_custom_call.1} parent=1 // loop_body
      %s22 = ssub.s32 %s17, 1
      %s23 = ssub.s32 %s17, 2
      %s24 = sadd.s32 %s17, 1
      %s25 = ssub.s32 %s17, %s24
      %p26 = scmp.eq.s32.totalorder %s25, 0
      %s28 = sadd.s32 %s27, 1
      %s29 = scalar_select %p26, %s27, %s28
      %p32 = pneg %p26
      %p33 = scmp.eq.s32.totalorder %s17, 1
      %p34 = por %p32, %p33
      %p35 = scmp.ne.s32.totalorder %s27, %s30
      %p36 = scmp.eq.s32.totalorder %s17, 0
      %p37 = por %p35, %p36
      %p38 = scmp.ne.s32.totalorder %s27, %s30
      %p39 = scmp.eq.s32.totalorder %s22, 1
      %p40 = por %p38, %p39
      %p41 = scmp.ne.s32.totalorder %s30, %s31
      %p42 = scmp.eq.s32.totalorder %s22, 0
      %p43 = por %p41, %p42
      %p44 = scmp.ne.s32.totalorder %s30, %s31
      %p45 = scmp.eq.s32.totalorder %s23, 1
      %p46 = por %p44, %p45
      %p48 = scmp.ne.s32.totalorder %s31, %s47
      %p49 = scmp.eq.s32.totalorder %s23, 0
      %p50 = por %p48, %p49
      %s51 = ssub.s32 %s17, %s24
      %p52 = scmp.eq.s32.totalorder %s51, 0
      %s54 = sadd.s32 %s53, 1
      %s55 = scalar_select %p52, %s53, %s54
      %p58 = pneg %p52
      %p59 = scmp.eq.s32.totalorder %s17, 1
      %p60 = por %p58, %p59
      %p61 = scmp.ne.s32.totalorder %s53, %s56
      %p62 = scmp.eq.s32.totalorder %s17, 0
      %p63 = por %p61, %p62
      %p64 = scmp.ne.s32.totalorder %s53, %s56
      %p65 = scmp.eq.s32.totalorder %s22, 1
      %p66 = por %p64, %p65
      %p67 = scmp.ne.s32.totalorder %s56, %s57
      %p68 = scmp.eq.s32.totalorder %s22, 0
      %p69 = por %p67, %p68
      %p70 = scmp.ne.s32.totalorder %s56, %s57
      %p71 = scmp.eq.s32.totalorder %s23, 1
      %p72 = por %p70, %p71
      %p74 = scmp.ne.s32.totalorder %s57, %s73
      %p75 = scmp.eq.s32.totalorder %s23, 0
      %p76 = por %p74, %p75
      %s78 = sadd.s32 %s77, 1
      %p81 = scmp.eq.s32.totalorder %s17, 1
      %p82 = scmp.ne.s32.totalorder %s77, %s79
      %p83 = scmp.eq.s32.totalorder %s17, 0
      %p84 = por %p82, %p83
      %p85 = scmp.ne.s32.totalorder %s77, %s79
      %p86 = scmp.eq.s32.totalorder %s22, 1
      %p87 = por %p85, %p86
      %p88 = scmp.ne.s32.totalorder %s79, %s80
      %p89 = scmp.eq.s32.totalorder %s22, 0
      %p90 = por %p88, %p89
      %p91 = scmp.ne.s32.totalorder %s79, %s80
      %p92 = scmp.eq.s32.totalorder %s23, 1
      %p93 = por %p91, %p92
      %p95 = scmp.ne.s32.totalorder %s80, %s94
      %p96 = scmp.eq.s32.totalorder %s23, 0
      %p97 = por %p95, %p96
      %s99 = sadd.s32 %s98, 1
      %p102 = scmp.eq.s32.totalorder %s17, 1
      %p103 = scmp.ne.s32.totalorder %s98, %s100
      %p104 = scmp.eq.s32.totalorder %s17, 0
      %p105 = por %p103, %p104
      %p106 = scmp.ne.s32.totalorder %s98, %s100
      %p107 = scmp.eq.s32.totalorder %s22, 1
      %p108 = por %p106, %p107
      %p109 = scmp.ne.s32.totalorder %s100, %s101
      %p110 = scmp.eq.s32.totalorder %s22, 0
      %p111 = por %p109, %p110
      %p112 = scmp.ne.s32.totalorder %s100, %s101
      %p113 = scmp.eq.s32.totalorder %s23, 1
      %p114 = por %p112, %p113
      %p116 = scmp.ne.s32.totalorder %s101, %s115
      %p117 = scmp.eq.s32.totalorder %s23, 0
      %p118 = por %p116, %p117
      %s120 = sadd.s32 %s119, 1
      %p123 = scmp.eq.s32.totalorder %s17, 1
      %p124 = scmp.ne.s32.totalorder %s119, %s121
      %p125 = scmp.eq.s32.totalorder %s17, 0
      %p126 = por %p124, %p125
      %p127 = scmp.ne.s32.totalorder %s119, %s121
      %p128 = scmp.eq.s32.totalorder %s22, 1
      %p129 = por %p127, %p128
      %p130 = scmp.ne.s32.totalorder %s121, %s122
      %p131 = scmp.eq.s32.totalorder %s22, 0
      %p132 = por %p130, %p131
      %p133 = scmp.ne.s32.totalorder %s121, %s122
      %p134 = scmp.eq.s32.totalorder %s23, 1
      %p135 = por %p133, %p134
      %p137 = scmp.ne.s32.totalorder %s122, %s136
      %p138 = scmp.eq.s32.totalorder %s23, 0
      %p139 = por %p137, %p138
      %s141 = sadd.s32 %s140, 1
      %p144 = scmp.eq.s32.totalorder %s17, 1
      %p145 = scmp.ne.s32.totalorder %s140, %s142
      %p146 = scmp.eq.s32.totalorder %s17, 0
      %p147 = por %p145, %p146
      %p148 = scmp.ne.s32.totalorder %s140, %s142
      %p149 = scmp.eq.s32.totalorder %s22, 1
      %p150 = por %p148, %p149
      %p151 = scmp.ne.s32.totalorder %s142, %s143
      %p152 = scmp.eq.s32.totalorder %s22, 0
      %p153 = por %p151, %p152
      %p154 = scmp.ne.s32.totalorder %s142, %s143
      %p155 = scmp.eq.s32.totalorder %s23, 1
      %p156 = por %p154, %p155
      %p158 = scmp.ne.s32.totalorder %s143, %s157
      %p159 = scmp.eq.s32.totalorder %s23, 0
      %p160 = por %p158, %p159
      %p161 = scmp.le.s32.totalorder 1, %s17
      %p162 = scmp.lt.s32.totalorder %s17, 3
      %p163 = pnand %p161, %p162
      %p164 = pneg %p163
      // Predicated region
      $region9: #{tpu_custom_call.1} parent=5 // pred_check
        _
      $region10: #{tpu_custom_call.1} parent=5 // pred_check_branch
        %166 = sbr.rel (%p163) target = $region12
      $region11: #{tpu_custom_call.1} parent=5 // pred_region
        %s167 = ssub.s32 %s17, 1
        // Predicated region
        $region13: #{tpu_custom_call.1} parent=11 // pred_check
          %p168 = pneg %p90
        $region14: #{tpu_custom_call.1} parent=11 // pred_check_branch
          %170 = sbr.rel (%p168) target = $region16
        $region15: #{tpu_custom_call.1} parent=11 // pred_region
          _
        $region16: #{tpu_custom_call.1} parent=11 // pred_fallthru
          _
        // Predicated region
        $region17: #{tpu_custom_call.1} parent=11 // pred_check
          %p171 = pneg %p111
        $region18: #{tpu_custom_call.1} parent=11 // pred_check_branch
          %173 = sbr.rel (%p171) target = $region20
        $region19: #{tpu_custom_call.1} parent=11 // pred_region
          _
        $region20: #{tpu_custom_call.1} parent=11 // pred_fallthru
          _
        // Predicated region
        $region21: #{tpu_custom_call.1} parent=11 // pred_check
          %p174 = pneg %p132
        $region22: #{tpu_custom_call.1} parent=11 // pred_check_branch
          %176 = sbr.rel (%p174) target = $region24
        $region23: #{tpu_custom_call.1} parent=11 // pred_region
          _
        $region24: #{tpu_custom_call.1} parent=11 // pred_fallthru
          _
      $region12: #{tpu_custom_call.1} parent=5 // pred_fallthru
        _
      %p177 = scmp.lt.s32.totalorder %s17, 2
      // Predicated region
      $region25: #{tpu_custom_call.1} parent=5 // pred_check
        %p178 = pneg %p177
      $region26: #{tpu_custom_call.1} parent=5 // pred_check_branch
        %180 = sbr.rel (%p178) target = $region28
      $region27: #{tpu_custom_call.1} parent=5 // pred_region
        // Predicated region
        $region29: #{tpu_custom_call.1} parent=27 // pred_check
          %p181 = pneg %p37
        $region30: #{tpu_custom_call.1} parent=27 // pred_check_branch
          %183 = sbr.rel (%p181) target = $region32
        $region31: #{tpu_custom_call.1} parent=27 // pred_region
          %s184 = smul.u32 4, %s17
          %p185 = scmp.lt.s32.totalorder %s184, 7
          %s186 = scalar_select %p185, %s184, 7
          %s187 = scalar_lea.vmem %s0, %s186
          %s188 = smul.u32 4, %s17
        $region32: #{tpu_custom_call.1} parent=27 // pred_fallthru
          _
        // Predicated region
        $region33: #{tpu_custom_call.1} parent=27 // pred_check
          %p189 = pneg %p63
        $region34: #{tpu_custom_call.1} parent=27 // pred_check_branch
          %191 = sbr.rel (%p189) target = $region36
        $region35: #{tpu_custom_call.1} parent=27 // pred_region
          %s192 = sand.u32 %s53, 1
          %s193 = scalar_lea.sflag [#allocation5], %s192
          %s194 = sand.u32 %s53, 1
          %s195 = smul.addr %s194, 256
          %s196 = scalar_lea.vmem [#allocation4], %s195
          %s197 = smul.u32 64, %s17
          %199 = vsyncadd %s193, 0
          %s200 = smul.addr %s197, 4
          %s201 = scalar_lea.hbm %s1, %s200
          %s202 = sshll.u32 %s201, 4
          %s203 = int_to_ptr.hbm [resolvable:$true] %s202
          %s204 = sshll.u32 %s196, 4
          %s205 = int_to_ptr.vmem [resolvable:$true] %s204
          %210 = dma.hbm_to_vmem [thread:$0]  %s203, 4096, %s205, %s193, 64, 64, 4
        $region36: #{tpu_custom_call.1} parent=27 // pred_fallthru
          _
      $region28: #{tpu_custom_call.1} parent=5 // pred_fallthru
        _
      %p211 = scmp.le.s32.totalorder 1, %s17
      %p212 = scmp.lt.s32.totalorder %s17, 3
      %p213 = pnand %p211, %p212
      %p214 = pneg %p213
      // Predicated region
      $region37: #{tpu_custom_call.1} parent=5 // pred_check
        _
      $region38: #{tpu_custom_call.1} parent=5 // pred_check_branch
        %216 = sbr.rel (%p213) target = $region40
      $region39: #{tpu_custom_call.1} parent=5 // pred_region
        %s217 = ssub.s32 %s17, 1
        %s218 = sand.u32 %s56, 1
        %s219 = scalar_lea.sflag [#allocation5], %s218
        %s220 = sand.u32 %s56, 1
        %s221 = smul.addr %s220, 256
        %s222 = scalar_lea.vmem [#allocation4], %s221
        // Predicated region
        $region41: #{tpu_custom_call.1} parent=39 // pred_check
          %p223 = pneg %p69
        $region42: #{tpu_custom_call.1} parent=39 // pred_check_branch
          %225 = sbr.rel (%p223) target = $region44
        $region43: #{tpu_custom_call.1} parent=39 // pred_region
          %227 = dma.done %s219, 4096
        $region44: #{tpu_custom_call.1} parent=39 // pred_fallthru
          _
        %s228 = smul.u32 4, %s22
        %p229 = scmp.lt.s32.totalorder %s228, 7
        %s230 = scalar_select %p229, %s228, 7
        %s231 = scalar_lea.vmem %s0, %s230
        %p232 = pneg %p43
        %p233 = pneg %p40
        %s234 = sand.u32 %s56, 1
        %s235 = scalar_lea.sflag [#allocation5], %s234
        %s236 = sand.u32 %s56, 1
        %s237 = smul.addr %s236, 256
        %s238 = scalar_lea.vmem [#allocation4], %s237
        %p239 = pneg %p69
        %p240 = pneg %p66
        %p241 = pneg %p90
        %p242 = pneg %p87
        %p243 = pneg %p111
        %p244 = pneg %p108
        %p245 = pneg %p132
        %p246 = pneg %p129
        %p247 = pneg %p153
        %p248 = pneg %p150
        %s249 = smul.u32 4, %s22
        %p250 = scmp.lt.s32.totalorder %s249, 7
        %s251 = scalar_select %p250, %s249, 7
        %s252 = scalar_lea.vmem %s0, %s251
        %s253 = smul.u32 4, %s22
        %s254 = smul.u32 64, %s22
        %p255 = scmp.eq.s32.totalorder %s22, 0
        // Predicated region
        $region45: #{tpu_custom_call.1} parent=39 // pred_check
          %p256 = pneg %p255
        $region46: #{tpu_custom_call.1} parent=39 // pred_check_branch
          %258 = sbr.rel (%p256) target = $region48
        $region47: #{tpu_custom_call.1} parent=39 // pred_region
          %259 = vst [vmem:[#allocation2] sm:$0x3] 0.0
        $region48: #{tpu_custom_call.1} parent=39 // pred_fallthru
          _
        %v260 = vld [vmem:[#allocation2] sm:$0x3]
        %v261 = vld [vmem:[%s252] sm:$0xf]
        %v262 = vld [vmem:[%s222] sm:$0xf]
        %v263 = vld [vmem:[%s222 + $0x4] sm:$0xf]
        %v264 = vld [vmem:[%s222 + $0x8] sm:$0xf]
        %v265 = vld [vmem:[%s222 + $0xc] sm:$0xf]
        %v266 = vld [vmem:[%s222 + $0x10] sm:$0xf]
        %v267 = vld [vmem:[%s222 + $0x14] sm:$0xf]
        %v268 = vld [vmem:[%s222 + $0x18] sm:$0xf]
        %v269 = vld [vmem:[%s222 + $0x1c] sm:$0xf]
        %v270 = vld [vmem:[%s222 + $0x20] sm:$0xf]
        %v271 = vld [vmem:[%s222 + $0x24] sm:$0xf]
        %v272 = vld [vmem:[%s222 + $0x28] sm:$0xf]
        %v273 = vld [vmem:[%s222 + $0x2c] sm:$0xf]
        %v274 = vld [vmem:[%s222 + $0x30] sm:$0xf]
        %v275 = vld [vmem:[%s222 + $0x34] sm:$0xf]
        %v276 = vld [vmem:[%s222 + $0x38] sm:$0xf]
        %v277 = vld [vmem:[%s222 + $0x3c] sm:$0xf]
        %v278 = vld [vmem:[%s222 + $0x40] sm:$0xf]
        %v279 = vld [vmem:[%s222 + $0x44] sm:$0xf]
        %v280 = vld [vmem:[%s222 + $0x48] sm:$0xf]
        %v281 = vld [vmem:[%s222 + $0x4c] sm:$0xf]
        %v282 = vld [vmem:[%s222 + $0x50] sm:$0xf]
        %v283 = vld [vmem:[%s222 + $0x54] sm:$0xf]
        %v284 = vld [vmem:[%s222 + $0x58] sm:$0xf]
        %v285 = vld [vmem:[%s222 + $0x5c] sm:$0xf]
        %v286 = vld [vmem:[%s222 + $0x60] sm:$0xf]
        %v287 = vld [vmem:[%s222 + $0x64] sm:$0xf]
        %v288 = vld [vmem:[%s222 + $0x68] sm:$0xf]
        %v289 = vld [vmem:[%s222 + $0x6c] sm:$0xf]
        %v290 = vld [vmem:[%s222 + $0x70] sm:$0xf]
        %v291 = vld [vmem:[%s222 + $0x74] sm:$0xf]
        %v292 = vld [vmem:[%s222 + $0x78] sm:$0xf]
        %v293 = vld [vmem:[%s222 + $0x7c] sm:$0xf]
        %v294 = vld [vmem:[%s222 + $0x80] sm:$0xf]
        %v295 = vld [vmem:[%s222 + $0x84] sm:$0xf]
        %v296 = vld [vmem:[%s222 + $0x88] sm:$0xf]
        %v297 = vld [vmem:[%s222 + $0x8c] sm:$0xf]
        %v298 = vld [vmem:[%s222 + $0x90] sm:$0xf]
        %v299 = vld [vmem:[%s222 + $0x94] sm:$0xf]
        %v300 = vld [vmem:[%s222 + $0x98] sm:$0xf]
        %v301 = vld [vmem:[%s222 + $0x9c] sm:$0xf]
        %v302 = vld [vmem:[%s222 + $0xa0] sm:$0xf]
        %v303 = vld [vmem:[%s222 + $0xa4] sm:$0xf]
        %v304 = vld [vmem:[%s222 + $0xa8] sm:$0xf]
        %v305 = vld [vmem:[%s222 + $0xac] sm:$0xf]
        %v306 = vld [vmem:[%s222 + $0xb0] sm:$0xf]
        %v307 = vld [vmem:[%s222 + $0xb4] sm:$0xf]
        %v308 = vld [vmem:[%s222 + $0xb8] sm:$0xf]
        %v309 = vld [vmem:[%s222 + $0xbc] sm:$0xf]
        %v310 = vld [vmem:[%s222 + $0xc0] sm:$0xf]
        %v311 = vld [vmem:[%s222 + $0xc4] sm:$0xf]
        %v312 = vld [vmem:[%s222 + $0xc8] sm:$0xf]
        %v313 = vld [vmem:[%s222 + $0xcc] sm:$0xf]
        %v314 = vld [vmem:[%s222 + $0xd0] sm:$0xf]
        %v315 = vld [vmem:[%s222 + $0xd4] sm:$0xf]
        %v316 = vld [vmem:[%s222 + $0xd8] sm:$0xf]
        %v317 = vld [vmem:[%s222 + $0xdc] sm:$0xf]
        %v318 = vld [vmem:[%s222 + $0xe0] sm:$0xf]
        %v319 = vld [vmem:[%s222 + $0xe4] sm:$0xf]
        %v320 = vld [vmem:[%s222 + $0xe8] sm:$0xf]
        %v321 = vld [vmem:[%s222 + $0xec] sm:$0xf]
        %v322 = vld [vmem:[%s222 + $0xf0] sm:$0xf]
        %v323 = vld [vmem:[%s222 + $0xf4] sm:$0xf]
        %v324 = vld [vmem:[%s222 + $0xf8] sm:$0xf]
        %v325 = vld [vmem:[%s222 + $0xfc] sm:$0xf]
        %327 = vst [vmem:[#allocation1] ss:$9 sm:$0xff] %v261
        %v328 = vld [vmem:[#allocation1] sm:$0xff]
        %v329 = vld [vmem:[#allocation1 + $0x9] sm:$0xff]
        %v330 = vld [vmem:[#allocation1 + $0x12] sm:$0xff]
        %v331 = vld [vmem:[#allocation1 + $0x1b] sm:$0xff]
        %v400 = vunpack.c.l.b16 %v262
        %v401 = vunpack.c.l.b16 %v263
        %v402 = vunpack.c.l.b16 %v264
        %v403 = vunpack.c.l.b16 %v265
        %v404 = vunpack.c.l.b16 %v266
        %v405 = vunpack.c.l.b16 %v267
        %v406 = vunpack.c.l.b16 %v268
        %v407 = vunpack.c.l.b16 %v269
        %v408 = vunpack.c.l.b16 %v270
        %v409 = vunpack.c.l.b16 %v271
        %v410 = vunpack.c.l.b16 %v272
        %v411 = vunpack.c.l.b16 %v273
        %v412 = vunpack.c.l.b16 %v274
        %v413 = vunpack.c.l.b16 %v275
        %v414 = vunpack.c.l.b16 %v276
        %v415 = vunpack.c.l.b16 %v277
        %v416 = vunpack.c.l.b16 %v278
        %v417 = vunpack.c.l.b16 %v279
        %v418 = vunpack.c.l.b16 %v280
        %v419 = vunpack.c.l.b16 %v281
        %v420 = vunpack.c.l.b16 %v282
        %v421 = vunpack.c.l.b16 %v283
        %v422 = vunpack.c.l.b16 %v284
        %v423 = vunpack.c.l.b16 %v285
        %v424 = vunpack.c.l.b16 %v286
        %v425 = vunpack.c.l.b16 %v287
        %v426 = vunpack.c.l.b16 %v288
        %v427 = vunpack.c.l.b16 %v289
        %v428 = vunpack.c.l.b16 %v290
        %v429 = vunpack.c.l.b16 %v291
        %v430 = vunpack.c.l.b16 %v292
        %v431 = vunpack.c.l.b16 %v293
        %v432 = vunpack.c.l.b16 %v294
        %v433 = vunpack.c.l.b16 %v295
        %v434 = vunpack.c.l.b16 %v296
        %v435 = vunpack.c.l.b16 %v297
        %v436 = vunpack.c.l.b16 %v298
        %v437 = vunpack.c.l.b16 %v299
        %v438 = vunpack.c.l.b16 %v300
        %v439 = vunpack.c.l.b16 %v301
        %v440 = vunpack.c.l.b16 %v302
        %v441 = vunpack.c.l.b16 %v303
        %v442 = vunpack.c.l.b16 %v304
        %v443 = vunpack.c.l.b16 %v305
        %v444 = vunpack.c.l.b16 %v306
        %v445 = vunpack.c.l.b16 %v307
        %v446 = vunpack.c.l.b16 %v308
        %v447 = vunpack.c.l.b16 %v309
        %v448 = vunpack.c.l.b16 %v310
        %v449 = vunpack.c.l.b16 %v311
        %v450 = vunpack.c.l.b16 %v312
        %v451 = vunpack.c.l.b16 %v313
        %v452 = vunpack.c.l.b16 %v314
        %v453 = vunpack.c.l.b16 %v315
        %v454 = vunpack.c.l.b16 %v316
        %v455 = vunpack.c.l.b16 %v317
        %v456 = vunpack.c.l.b16 %v318
        %v457 = vunpack.c.l.b16 %v319
        %v458 = vunpack.c.l.b16 %v320
        %v459 = vunpack.c.l.b16 %v321
        %v460 = vunpack.c.l.b16 %v322
        %v461 = vunpack.c.l.b16 %v323
        %v462 = vunpack.c.l.b16 %v324
        %v463 = vunpack.c.l.b16 %v325
        %v464 = vpack.c.b16 %v401, %v400
        %v465 = vpack.c.b16 %v403, %v402
        %v466 = vpack.c.b16 %v405, %v404
        %v467 = vpack.c.b16 %v407, %v406
        %v468 = vpack.c.b16 %v409, %v408
        %v469 = vpack.c.b16 %v411, %v410
        %v470 = vpack.c.b16 %v413, %v412
        %v471 = vpack.c.b16 %v415, %v414
        %v472 = vpack.c.b16 %v417, %v416
        %v473 = vpack.c.b16 %v419, %v418
        %v474 = vpack.c.b16 %v421, %v420
        %v475 = vpack.c.b16 %v423, %v422
        %v476 = vpack.c.b16 %v425, %v424
        %v477 = vpack.c.b16 %v427, %v426
        %v478 = vpack.c.b16 %v429, %v428
        %v479 = vpack.c.b16 %v431, %v430
        %v480 = vpack.c.b16 %v433, %v432
        %v481 = vpack.c.b16 %v435, %v434
        %v482 = vpack.c.b16 %v437, %v436
        %v483 = vpack.c.b16 %v439, %v438
        %v484 = vpack.c.b16 %v441, %v440
        %v485 = vpack.c.b16 %v443, %v442
        %v486 = vpack.c.b16 %v445, %v444
        %v487 = vpack.c.b16 %v447, %v446
        %v488 = vpack.c.b16 %v449, %v448
        %v489 = vpack.c.b16 %v451, %v450
        %v490 = vpack.c.b16 %v453, %v452
        %v491 = vpack.c.b16 %v455, %v454
        %v492 = vpack.c.b16 %v457, %v456
        %v493 = vpack.c.b16 %v459, %v458
        %v494 = vpack.c.b16 %v461, %v460
        %v495 = vpack.c.b16 %v463, %v462
        %528 = vmatpush.bf16.msra.mxu0 %v471
        %529 = vmatpush.bf16.msra.mxu0 %v470
        %530 = vmatpush.bf16.msra.mxu0 %v469
        %531 = vmatpush.bf16.msra.mxu0 %v468
        %532 = vmatpush.bf16.msra.mxu0 %v467
        %533 = vmatpush.bf16.msra.mxu0 %v466
        %534 = vmatpush.bf16.msra.mxu0 %v465
        %535 = vmatpush.bf16.msra.mxu0 %v464
        %536 = vmatmul.bf16.gmra.mxu0 %v328
        %v537 = vpop.f32.mrf.mxu0
        %v538 = vadd.f32 0.0, %v537
        %v539 = vpop.f32.mrf.mxu0
        %540 = vdwg.mxu0
        %541 = vmatpush.bf16.msra.mxu0 %v479
        %542 = vmatpush.bf16.msra.mxu0 %v478
        %543 = vmatpush.bf16.msra.mxu0 %v477
        %544 = vmatpush.bf16.msra.mxu0 %v476
        %545 = vmatpush.bf16.msra.mxu0 %v475
        %546 = vmatpush.bf16.msra.mxu0 %v474
        %547 = vmatpush.bf16.msra.mxu0 %v473
        %548 = vmatpush.bf16.msra.mxu0 %v472
        %549 = vmatmul.bf16.gmra.mxu0 %v329
        %v550 = vpop.f32.mrf.mxu0
        %v551 = vadd.f32 %v538, %v550
        %v552 = vpop.f32.mrf.mxu0
        %553 = vdwg.mxu0
        %554 = vmatpush.bf16.msra.mxu0 %v487
        %555 = vmatpush.bf16.msra.mxu0 %v486
        %556 = vmatpush.bf16.msra.mxu0 %v485
        %557 = vmatpush.bf16.msra.mxu0 %v484
        %558 = vmatpush.bf16.msra.mxu0 %v483
        %559 = vmatpush.bf16.msra.mxu0 %v482
        %560 = vmatpush.bf16.msra.mxu0 %v481
        %561 = vmatpush.bf16.msra.mxu0 %v480
        %562 = vmatmul.bf16.gmra.mxu0 %v330
        %v563 = vpop.f32.mrf.mxu0
        %v564 = vadd.f32 %v551, %v563
        %v565 = vpop.f32.mrf.mxu0
        %566 = vdwg.mxu0
        %567 = vmatpush.bf16.msra.mxu0 %v495
        %568 = vmatpush.bf16.msra.mxu0 %v494
        %569 = vmatpush.bf16.msra.mxu0 %v493
        %570 = vmatpush.bf16.msra.mxu0 %v492
        %571 = vmatpush.bf16.msra.mxu0 %v491
        %572 = vmatpush.bf16.msra.mxu0 %v490
        %573 = vmatpush.bf16.msra.mxu0 %v489
        %574 = vmatpush.bf16.msra.mxu0 %v488
        %575 = vmatmul.bf16.gmra.mxu0 %v331
        %v576 = vpop.f32.mrf.mxu0
        %v577 = vadd.f32 %v564, %v576
        %v578 = vpop.f32.mrf.mxu0
        %579 = vdwg.mxu0
        %v580 = vadd.f32 %v260, %v577
        %581 = vst [vmem:[#allocation2] sm:$0x3] %v580
        %p582 = scmp.eq.s32.totalorder %s22, 1
        // Predicated region
        $region49: #{tpu_custom_call.1} parent=39 // pred_check
          %p583 = pneg %p582
        $region50: #{tpu_custom_call.1} parent=39 // pred_check_branch
          %585 = sbr.rel (%p583) target = $region52
        $region51: #{tpu_custom_call.1} parent=39 // pred_region
          %v586 = vld [vmem:[#allocation2] sm:$0x3]
          %v587 = vld [vmem:[%s2] sm:$0x1]
          %v589 = vperm.slane %v587, 0
          %v591 = vadd.f32 %v586, %v589
          %v592 = vmul.f32 %v591, 0.2
          %v593 = vmax.f32 %v591, %v592
          %v594 = vld [vmem:[%s3] sm:$0xff]
          %v595 = vld [vmem:[%s3 + $0x8] sm:$0xff]
          %v596 = vld [vmem:[%s3 + $0x10] sm:$0xff]
          %v597 = vld [vmem:[%s3 + $0x18] sm:$0xff]
          %v598 = vld [vmem:[%s3 + $0x20] sm:$0xff]
          %v599 = vld [vmem:[%s3 + $0x28] sm:$0xff]
          %v600 = vld [vmem:[%s3 + $0x30] sm:$0xff]
          %v601 = vld [vmem:[%s3 + $0x38] sm:$0xff]
          %v602 = vld [vmem:[%s3 + $0x40] sm:$0xff]
          %v603 = vld [vmem:[%s3 + $0x48] sm:$0xff]
          %v604 = vld [vmem:[%s3 + $0x50] sm:$0xff]
          %v605 = vld [vmem:[%s3 + $0x58] sm:$0xff]
          %v606 = vld [vmem:[%s3 + $0x60] sm:$0xff]
          %v607 = vld [vmem:[%s3 + $0x68] sm:$0xff]
          %v608 = vld [vmem:[%s3 + $0x70] sm:$0xff]
          %v609 = vld [vmem:[%s3 + $0x78] sm:$0xff]
          %vm610 = vcmask 1041408
          %v611 = vsel %vm610, %v593, 0.0
          %v612 = vrot.slane %v611, 4
          %v613 = vadd.f32 %v611, %v612
          %v614 = vrot.slane %v613, 2
          %v615 = vadd.f32 %v613, %v614
          %v616 = vrot.slane %v615, 1
          %v617 = vadd.f32 %v615, %v616
          %v618 = vmul.f32 %v617, 0.5
          %v619 = vld [vmem:[#allocation3] sm:$0x1]
          %620 = vmatpush.msra.mxu0 %v609
          %621 = vmatpush.msra.mxu0 %v608
          %622 = vmatpush.msra.mxu0 %v607
          %623 = vmatpush.msra.mxu0 %v606
          %624 = vmatpush.msra.mxu0 %v605
          %625 = vmatpush.msra.mxu0 %v604
          %626 = vmatpush.msra.mxu0 %v603
          %627 = vmatpush.msra.mxu0 %v602
          %628 = vmatpush.msra.mxu0 %v601
          %629 = vmatpush.msra.mxu0 %v600
          %630 = vmatpush.msra.mxu0 %v599
          %631 = vmatpush.msra.mxu0 %v598
          %632 = vmatpush.msra.mxu0 %v597
          %633 = vmatpush.msra.mxu0 %v596
          %634 = vmatpush.msra.mxu0 %v595
          %635 = vmatpush.msra.mxu0 %v594
          %636 = vmatmul.f32.gmra.mxu0 %v618
          %v637 = vpop.f32.mrf.mxu0
          %v638 = vadd.f32 %v619, %v637
          %639 = vdwg.mxu0
          %s640 = vtos %v638
          %s641 = ssub.f32 0.0, %s640
          %s642 = scalar_lea.smem [#allocation7], 0
          %643 = sst [smem:[%s642]] %s641
        $region52: #{tpu_custom_call.1} parent=39 // pred_fallthru
          _
        // Predicated region
        $region53: #{tpu_custom_call.1} parent=39 // pred_check
          %p644 = pneg %p150
        $region54: #{tpu_custom_call.1} parent=39 // pred_check_branch
          %646 = sbr.rel (%p644) target = $region56
        $region55: #{tpu_custom_call.1} parent=39 // pred_region
          %648 = vsyncadd [#allocation6], 0
          %s650 = sshll.u32 %s5, 4
          %s651 = int_to_ptr.hbm [resolvable:$true] %s650
          %653 = dma.smem_to_hbm [#allocation7], 16, %s651, [#allocation6]
        $region56: #{tpu_custom_call.1} parent=39 // pred_fallthru
          _
        // Predicated region
        $region57: #{tpu_custom_call.1} parent=39 // pred_check
          %p654 = pneg %p150
        $region58: #{tpu_custom_call.1} parent=39 // pred_check_branch
          %656 = sbr.rel (%p654) target = $region60
        $region59: #{tpu_custom_call.1} parent=39 // pred_region
          %658 = dma.done [#allocation6], 16
        $region60: #{tpu_custom_call.1} parent=39 // pred_fallthru
          _
        %659 = sfence
      $region40: #{tpu_custom_call.1} parent=5 // pred_fallthru
        _
      %p660 = scmp.le.s32.totalorder 2, %s17
      // Predicated region
      $region61: #{tpu_custom_call.1} parent=5 // pred_check
        %p661 = pneg %p660
      $region62: #{tpu_custom_call.1} parent=5 // pred_check_branch
        %663 = sbr.rel (%p661) target = $region64
      $region63: #{tpu_custom_call.1} parent=5 // pred_region
        %s664 = ssub.s32 %s17, 2
      $region64: #{tpu_custom_call.1} parent=5 // pred_fallthru
        _
    $region6: #{tpu_custom_call.1} parent=1 // loop_footer
      %s21 = sadd.s32 1, %s17
    $region7: #{tpu_custom_call.1} parent=1 // loop_footer_branch
      %16 = sbr.rel target = $region3
    $region8: #{tpu_custom_call.1} parent=1 // loop_exit
      _
    %665 = vsyncpa [#allocation5], 1
    %s666 = scalar_lea.sflag [#allocation5], 1
    %667 = vsyncpa %s666, 1
    %668 = vsyncpa [#allocation6], 1
    %s669 = scalar_lea.sflag [#allocation6], 1
    %670 = vsyncpa %s669, 1

</llo_original>
